<compile_context>
chip_gen: v6e
topology: v6e:2x2x1
jax: 0.10.0
libtpu: 0.0.40
codegen_flags: <defaults>
</compile_context>

<pallas_src>
import functools
import math

import jax
import jax.numpy as jnp
from jax.experimental import pallas as pl
from jax.experimental.pallas import tpu as pltpu

_LANES = 128
_PAD_LOGIT = -1e4  # term2(pad) == 0 exactly and targets pad == 0 -> zero contribution
_VMEM_INPUT_BUDGET = 20 * 1024 * 1024  # cap on double-buffered input footprint


def _cdiv(a, b):
    return -(-a // b)


def _round_up(a, b):
    return _cdiv(a, b) * b


def _sublane_pack(dtype):
    # rows-per-vreg packing requirement: f32 -> 8, bf16 -> 16, int8/bool -> 32
    return 8 * max(1, 4 // jnp.dtype(dtype).itemsize)


def _default_num_splits():
    """2-way split only where there are two TensorCores behind one device."""
    try:
        kind = jax.devices()[0].device_kind.lower()
    except Exception:
        return 1
    if "lite" in kind or "v5e" in kind or "v6e" in kind or "v2" in kind or "v3" in kind:
        return 1
    if any(t in kind for t in ("v4", "v5p", "v5", "v7")):
        return 2
    return 1


def _focal_kernel(logits_ref, targets_ref, out_ref, *, gamma, batch, rows,
                  tile_rows, blocks_per_split, needs_mask):
    c = pl.program_id(0)  # split ('parallel') axis
    i = pl.program_id(1)  # reduction axis

    @pl.when(i == 0)
    def _():
        out_ref[...] = jnp.zeros_like(out_ref)

    x = logits_ref[...].astype(jnp.float32)   # (B, TR, 128)
    t = targets_ref[...].astype(jnp.float32)  # (B, TR, 128)

    # Stable log-sigmoid pair: lp = log(p), l1mp = log(1-p), p = sigmoid(x).
    s = jnp.log1p(jnp.exp(-jnp.abs(x)))
    lp = jnp.minimum(x, 0.0) - s
    l1mp = lp - x

    term1 = jnp.exp(gamma * l1mp) * lp      # (1-p)^gamma * log(p)
    term2 = jnp.exp(gamma * lp) * l1mp      # p^gamma * log(1-p)
    # NOTE: PyTorch's isinf-zeroing guards are intentionally dropped; with the stable
    # formulation they never fire for finite logits (documented divergence only for
    # logits beyond f32 sigmoid saturation).

    t_sum = jnp.sum(t, axis=0)       # (TR, 128)
    t1_sum = jnp.sum(term1, axis=0)  # (TR, 128)
    t2_sum = jnp.sum(term2, axis=0)  # (TR, 128)

    partial = t_sum * t1_sum + (batch - t_sum) * t2_sum   # (TR, 128)

    if needs_mask:
        # Mask rows beyond the real (lane-padded) data; also fully masks any
        # clamped/duplicated over-the-end block on the split axis.
        row_start = (c * blocks_per_split + i) * tile_rows
        row_ids = row_start + jax.lax.broadcasted_iota(jnp.int32, (tile_rows, 1), 0)
        partial = jnp.where(row_ids < rows, partial, 0.0)

    # Tile-aligned reshape (TR,128)->(TR//8,8,128): pure vreg regrouping, VPU adds only.
    out_ref[...] += jnp.sum(partial.reshape(tile_rows // 8, 8, _LANES), axis=0)


def sigmoid_focal_loss(logits, targets, gamma=0.25, tr=1024, num_splits=None):
    """logits, targets: [B, C, ...] arrays of identical shape. Returns scalar f32.

    Implements the SigmoidFocalLoss forward with module defaults
    (alpha=None, sigmoid=True, diagonal=False, reduction='mean').
    """
    # TODO(synk): alpha-balanced (alpha is not None) and diagonal-masked (diagonal=True)
    # non-default variants are not implemented.
    assert logits.shape == targets.shape
    B = logits.shape[0]
    N = math.prod(logits.shape[1:])

    if num_splits is None:
        num_splits = _default_num_splits()
    num_splits = max(1, num_splits)

    # Keep native dtypes; only reshape (free) and minimally pad to the lane/sublane tile.
    logits2 = logits.reshape(B, N)
    targets2 = targets.reshape(B, N)
    pack = max(_sublane_pack(logits2.dtype), _sublane_pack(targets2.dtype))  # 8/16/32

    r = _cdiv(N, _LANES)                 # 128-lane rows of real data
    r_pad = _round_up(r, pack)           # minimal sublane-pack alignment
    n_pad = r_pad * _LANES
    if n_pad > N:
        pad = n_pad - N
        # Pad values contribute exactly zero to the factored sum.
        logits2 = jnp.pad(logits2, ((0, 0), (0, pad)), constant_values=_PAD_LOGIT)
        targets2 = jnp.pad(targets2, ((0, 0), (0, pad)), constant_values=0)
    logits3 = logits2.reshape(B, r_pad, _LANES)
    targets3 = targets2.reshape(B, r_pad, _LANES)

    # Tile rows: multiple of `pack`, capped by a VMEM budget and by what's actually needed.
    it_sum = logits3.dtype.itemsize + targets3.dtype.itemsize
    tr_budget = max(pack, (_VMEM_INPUT_BUDGET // (2 * B * _LANES * it_sum)) // pack * pack)
    tr_eff = min(_round_up(tr, pack), tr_budget,
                 _round_up(_cdiv(r_pad, num_splits), pack))

    total_blocks = _cdiv(r_pad, tr_eff)
    num_splits = max(1, min(num_splits, total_blocks))
    blocks_per_split = _cdiv(total_blocks, num_splits)
    overflow = num_splits * blocks_per_split > total_blocks
    needs_mask = num_splits * blocks_per_split * tr_eff != r_pad

    if overflow:
        def in_map(c, i):
            return (0, jnp.minimum(c * blocks_per_split + i, total_blocks - 1), 0)
    else:
        def in_map(c, i):
            return (0, c * blocks_per_split + i, 0)

    kernel = functools.partial(
        _focal_kernel, gamma=gamma, batch=B, rows=r_pad, tile_rows=tr_eff,
        blocks_per_split=blocks_per_split, needs_mask=needs_mask)

    out = pl.pallas_call(
        kernel,
        out_shape=jax.ShapeDtypeStruct((num_splits * 8, _LANES), jnp.float32),
        grid_spec=pltpu.PrefetchScalarGridSpec(
            num_scalar_prefetch=0,
            grid=(num_splits, blocks_per_split),
            in_specs=[
                pl.BlockSpec((B, tr_eff, _LANES), in_map),
                pl.BlockSpec((B, tr_eff, _LANES), in_map),
            ],
            out_specs=pl.BlockSpec((8, _LANES), lambda c, i: (c, 0)),
        ),
        compiler_params=pltpu.CompilerParams(
            dimension_semantics=("parallel", "arbitrary"),
            vmem_limit_bytes=32 * 1024 * 1024),
        cost_estimate=pl.CostEstimate(
            flops=18 * B * n_pad,
            transcendentals=4 * B * n_pad,
            bytes_accessed=B * n_pad * it_sum + num_splits * 8 * _LANES * 4),
    )(logits3, targets3)

    total = jnp.sum(out)
    # mean over B*B*N elements, then scaled by -(1/B)  ->  -Sum / (B^3 * N)
    return -total / jnp.float32(B * B * B * N)


def _ref_loss(logits, targets, gamma=0.25):
    """Pure-JAX mirror of the PyTorch SigmoidFocalLoss.forward (defaults)."""
    B = logits.shape[0]
    p = jax.nn.sigmoid(logits.astype(jnp.float32))
    t = targets.astype(jnp.float32)
    term1 = (1.0 - p) ** gamma * jnp.log(p)
    term1 = jnp.where(jnp.isinf(term1), 0.0, term1)
    term2 = p ** gamma * jnp.log(1.0 - p)
    term2 = jnp.where(jnp.isinf(term2), 0.0, term2)
    y = jnp.expand_dims(t, 1)                       # [B,1,...]
    sfl = jnp.mean(y * term1 + (1.0 - y) * term2)   # broadcasts to [B,B,...]
    return -(1.0 / B) * sfl


if __name__ == "__main__":
    key = jax.random.PRNGKey(0)

    def check(shape, scale=3.0, dtype=jnp.float32, tol=1e-4, **kw):
        k1, k2 = jax.random.split(jax.random.fold_in(key, sum(shape)))
        logits = (jax.random.normal(k1, shape, dtype=jnp.float32) * scale).astype(dtype)
        targets = (jax.random.uniform(k2, shape) > 0.5).astype(dtype)
        loss = sigmoid_focal_loss(logits, targets, **kw)
        jax.block_until_ready(loss)
        ref = _ref_loss(logits, targets)
        assert jnp.allclose(loss, ref, rtol=tol, atol=1e-6), (shape, loss, ref)
        return loss

    # Main example: NCHW [2, 4, 16, 16] (N = 1024, no padding, single tile).
    check((2, 4, 16, 16))
    # Ragged feature size (C*H*W = 969, not a multiple of 128) -> lane padding path.
    check((2, 3, 17, 19))
    # Larger case with a small tile to exercise multi-step accumulation per core.
    check((2, 16, 32, 32), tr=32)
    # Odd block count with a forced 2-way split -> exercises clamped index_map + row mask.
    check((2, 36, 16, 16), tr=32, num_splits=2)
    # Native bf16 inputs DMA'd without wrapper upcast.
    check((2, 4, 16, 16), dtype=jnp.bfloat16, tol=2e-3)

    print("KERNEL_OK")
</pallas_src>

<mosaic_0001>
module attributes {stable_mosaic.version = 11 : i64} {
  func.func @_focal_kernel(%arg0: i32, %arg1: i32, %arg2: memref<2x8x128xf32, #tpu.memory_space<vmem>>, %arg3: memref<2x8x128xf32, #tpu.memory_space<vmem>>, %arg4: memref<8x128xf32, #tpu.memory_space<vmem>>) attributes {dimension_semantics = [#tpu.dimension_semantics<parallel>, #tpu.dimension_semantics<arbitrary>], iteration_bounds = array<i64: 1, 1>, scalar_prefetch = 0 : i64, scratch_operands = 0 : i64, tpu.core_type = #tpu.core_type<tc>, window_params = [{transform_indices = @transform_0, window_bounds = array<i64: 2, 8, 128>}, {transform_indices = @transform_1, window_bounds = array<i64: 2, 8, 128>}, {transform_indices = @transform_2, window_bounds = array<i64: 8, 128>}]} {
    %c0_i32 = arith.constant 0 : i32
    %0 = arith.cmpi eq, %arg1, %c0_i32 : i32
    %1 = arith.extui %0 : i1 to i32
    %c0_i32_0 = arith.constant 0 : i32
    %2 = arith.cmpi ne, %1, %c0_i32_0 : i32
    scf.if %2 {
      %cst_18 = arith.constant 0.000000e+00 : f32
      %35 = vector.broadcast %cst_18 : f32 to vector<8x128xf32>
      %c0_19 = arith.constant 0 : index
      %c0_20 = arith.constant 0 : index
      %36 = vector.load %arg4[%c0_19, %c0_20] : memref<8x128xf32, #tpu.memory_space<vmem>>, vector<8x128xf32>
      tpu.vector_store %arg4[%c0_19, %c0_20], %35 {strides = array<i32>} : memref<8x128xf32, #tpu.memory_space<vmem>>, vector<8x128xf32>,
    } else {
    }
    %c0 = arith.constant 0 : index
    %c0_1 = arith.constant 0 : index
    %c0_2 = arith.constant 0 : index
    %3 = vector.load %arg2[%c0, %c0_1, %c0_2] : memref<2x8x128xf32, #tpu.memory_space<vmem>>, vector<2x8x128xf32>
    %c0_3 = arith.constant 0 : index
    %c0_4 = arith.constant 0 : index
    %c0_5 = arith.constant 0 : index
    %4 = vector.load %arg3[%c0_3, %c0_4, %c0_5] : memref<2x8x128xf32, #tpu.memory_space<vmem>>, vector<2x8x128xf32>
    %5 = math.absf %3 : vector<2x8x128xf32>
    %cst = arith.constant 0.000000e+00 : f32
    %6 = vector.broadcast %cst : f32 to vector<2x8x128xf32>
    %7 = arith.subf %6, %5 : vector<2x8x128xf32>
    %8 = math.exp %7 : vector<2x8x128xf32>
    %9 = math.log1p %8 : vector<2x8x128xf32>
    %cst_6 = arith.constant 0.000000e+00 : f32
    %10 = vector.broadcast %cst_6 : f32 to vector<2x8x128xf32>
    %11 = arith.minimumf %3, %10 : vector<2x8x128xf32>
    %12 = arith.subf %11, %9 : vector<2x8x128xf32>
    %13 = arith.subf %12, %3 : vector<2x8x128xf32>
    %cst_7 = arith.constant 2.500000e-01 : f32
    %14 = vector.broadcast %cst_7 : f32 to vector<2x8x128xf32>
    %15 = arith.mulf %14, %13 : vector<2x8x128xf32>
    %16 = math.exp %15 : vector<2x8x128xf32>
    %17 = arith.mulf %16, %12 : vector<2x8x128xf32>
    %cst_8 = arith.constant 2.500000e-01 : f32
    %18 = vector.broadcast %cst_8 : f32 to vector<2x8x128xf32>
    %19 = arith.mulf %18, %12 : vector<2x8x128xf32>
    %20 = math.exp %19 : vector<2x8x128xf32>
    %21 = arith.mulf %20, %13 : vector<2x8x128xf32>
    %cst_9 = arith.constant dense<0.000000e+00> : vector<8x128xf32>
    %22 = vector.multi_reduction <add>, %4, %cst_9 [0] : vector<2x8x128xf32> to vector<8x128xf32>
    %cst_10 = arith.constant dense<0.000000e+00> : vector<8x128xf32>
    %23 = vector.multi_reduction <add>, %17, %cst_10 [0] : vector<2x8x128xf32> to vector<8x128xf32>
    %cst_11 = arith.constant dense<0.000000e+00> : vector<8x128xf32>
    %24 = vector.multi_reduction <add>, %21, %cst_11 [0] : vector<2x8x128xf32> to vector<8x128xf32>
    %25 = arith.mulf %22, %23 : vector<8x128xf32>
    %cst_12 = arith.constant 2.000000e+00 : f32
    %26 = vector.broadcast %cst_12 : f32 to vector<8x128xf32>
    %27 = arith.subf %26, %22 : vector<8x128xf32>
    %28 = arith.mulf %27, %24 : vector<8x128xf32>
    %29 = arith.addf %25, %28 : vector<8x128xf32>
    %c0_13 = arith.constant 0 : index
    %c0_14 = arith.constant 0 : index
    %30 = vector.load %arg4[%c0_13, %c0_14] : memref<8x128xf32, #tpu.memory_space<vmem>>, vector<8x128xf32>
    %31 = vector.shape_cast %29 : vector<8x128xf32> to vector<1x8x128xf32>
    %cst_15 = arith.constant dense<0.000000e+00> : vector<8x128xf32>
    %32 = vector.multi_reduction <add>, %31, %cst_15 [0] : vector<1x8x128xf32> to vector<8x128xf32>
    %33 = arith.addf %30, %32 : vector<8x128xf32>
    %c0_16 = arith.constant 0 : index
    %c0_17 = arith.constant 0 : index
    %34 = vector.load %arg4[%c0_16, %c0_17] : memref<8x128xf32, #tpu.memory_space<vmem>>, vector<8x128xf32>
    tpu.vector_store %arg4[%c0_16, %c0_17], %33 {strides = array<i32>} : memref<8x128xf32, #tpu.memory_space<vmem>>, vector<8x128xf32>,
    return
  }
  func.func @transform_0(%arg0: i32, %arg1: i32) -> (i32, i32, i32) {
    %c1_i32 = arith.constant 1 : i32
    %0 = arith.muli %arg0, %c1_i32 : i32
    %1 = arith.addi %0, %arg1 : i32
    %c0_i32 = arith.constant 0 : i32
    %c0_i32_0 = arith.constant 0 : i32
    %c0_i32_1 = arith.constant 0 : i32
    return %c0_i32, %1, %c0_i32_0 : i32, i32, i32
  }
  func.func @transform_1(%arg0: i32, %arg1: i32) -> (i32, i32, i32) {
    %c1_i32 = arith.constant 1 : i32
    %0 = arith.muli %arg0, %c1_i32 : i32
    %1 = arith.addi %0, %arg1 : i32
    %c0_i32 = arith.constant 0 : i32
    %c0_i32_0 = arith.constant 0 : i32
    %c0_i32_1 = arith.constant 0 : i32
    return %c0_i32, %1, %c0_i32_0 : i32, i32, i32
  }
  func.func @transform_2(%arg0: i32, %arg1: i32) -> (i32, i32) {
    %c0_i32 = arith.constant 0 : i32
    %c0_i32_0 = arith.constant 0 : i32
    return %arg0, %c0_i32 : i32, i32
  }
}

</mosaic_0001>

<llo_original>
// kernel: tpu_custom_call.1
$region0: #{tpu_custom_call.1}
  #allocation0 [shape = 'u32[]', space=smem, size = 0x4, offset = 0x4, fixed_abs, tag = 'smem constant byte address 0x4 - core index']
  #allocation1 [shape = 'u32[144,128]{1,0:T(1,128)}', space=vmem, size = 0x12000, scoped, tag = 'internal scratch']
  %s0 = inlined_call_operand.hbm [shape: f32[2,8,128], index: 0, kind: input, shape index: {}]
  %s1 = inlined_call_operand.hbm [shape: f32[2,8,128], index: 1, kind: input, shape index: {}]
  %s2 = inlined_call_operand.hbm [shape: f32[8,128], index: 2, kind: output, shape index: {}]
  %s3 = sld [smem:[#allocation0]]
  $region30: #{tpu_custom_call.1} parent=0
    _
  %s5 = ssub.s32 1, %s3
  %s6 = scalar_select 0, %s5, %s3
  $region1: #{tpu_custom_call.1} parent=0
    #allocation2 [shape = 'u8[8192]{0}', space=vmem, size = 0x2000, scoped, tag = 'input window, operand 0, single buffered']
    #allocation3 [shape = 's32[1]{0}', space=sflag, size = 0x4, scoped, tag = 'scoped memory for tpu_custom_call.1']
    #allocation4 [shape = 's32[1]{0}', space=sflag, size = 0x4, scoped, tag = 'scoped memory for tpu_custom_call.1']
    #allocation5 [shape = 'u8[8192]{0}', space=vmem, size = 0x2000, scoped, tag = 'input window, operand 1, single buffered']
    #allocation6 [shape = 's32[1]{0}', space=sflag, size = 0x4, scoped, tag = 'scoped memory for tpu_custom_call.1']
    #allocation7 [shape = 'u8[4096]{0}', space=vmem, size = 0x1000, scoped, tag = 'output window, operand 0, single buffered']
    %7 = vsyncpa [#allocation3], 0
    %8 = vsyncpa [#allocation6], 0
    %9 = vsyncpa [#allocation4], 0
    // Predicated region
    $region2: #{tpu_custom_call.1} parent=1 // pred_check
      _
    $region3: #{tpu_custom_call.1} parent=1 // pred_check_branch
      %11 = sbr.rel (0) target = $region5
    $region4: #{tpu_custom_call.1} parent=1 // pred_region
      %s12 = sadd.s32 0, 0
      %s14 = ssub.s32 256, 256
      %15 = vsyncadd [#allocation3], %s14
      %s16 = smul.addr %s12, 128
      %s17 = scalar_lea.hbm %s0, %s16
      %s18 = sshll.u32 [#allocation2], 4
      %s19 = int_to_ptr.vmem [resolvable:$true] %s18
      %24 = dma.hbm_to_vmem [thread:$0]  %s17, 256, %s19, [#allocation3], 128, 128, 8
    $region5: #{tpu_custom_call.1} parent=1 // pred_fallthru
      _
    // Predicated region
    $region6: #{tpu_custom_call.1} parent=1 // pred_check
      _
    $region7: #{tpu_custom_call.1} parent=1 // pred_check_branch
      %26 = sbr.rel (0) target = $region9
    $region8: #{tpu_custom_call.1} parent=1 // pred_region
      %s27 = sadd.s32 0, 0
      %s29 = ssub.s32 256, 256
      %30 = vsyncadd [#allocation6], %s29
      %s31 = smul.addr %s27, 128
      %s32 = scalar_lea.hbm %s1, %s31
      %s33 = sshll.u32 [#allocation5], 4
      %s34 = int_to_ptr.vmem [resolvable:$true] %s33
      %39 = dma.hbm_to_vmem [thread:$0]  %s32, 256, %s34, [#allocation6], 128, 128, 8
    $region9: #{tpu_custom_call.1} parent=1 // pred_fallthru
      _
    // Predicated region
    $region10: #{tpu_custom_call.1} parent=1 // pred_check
      _
    $region11: #{tpu_custom_call.1} parent=1 // pred_check_branch
      %41 = sbr.rel (0) target = $region13
    $region12: #{tpu_custom_call.1} parent=1 // pred_region
      %42 = dma.done [#allocation3], 256
    $region13: #{tpu_custom_call.1} parent=1 // pred_fallthru
      _
    // Predicated region
    $region14: #{tpu_custom_call.1} parent=1 // pred_check
      _
    $region15: #{tpu_custom_call.1} parent=1 // pred_check_branch
      %44 = sbr.rel (0) target = $region17
    $region16: #{tpu_custom_call.1} parent=1 // pred_region
      %45 = dma.done [#allocation6], 256
    $region17: #{tpu_custom_call.1} parent=1 // pred_fallthru
      _
    %s46 = sadd.s32 0, 0
    %s47 = sadd.s32 0, 0
    %p48 = scmp.eq.s32.totalorder 0, 0
    // Predicated region
    $region18: #{tpu_custom_call.1} parent=1 // pred_check
      %p49 = pneg %p48
    $region19: #{tpu_custom_call.1} parent=1 // pred_check_branch
      %51 = sbr.rel (%p49) target = $region21
    $region20: #{tpu_custom_call.1} parent=1 // pred_region
      %52 = vst [vmem:[#allocation7] sm:$0xff] 0.0
    $region21: #{tpu_custom_call.1} parent=1 // pred_fallthru
      _
    %v53 = vld [vmem:[#allocation2] sm:$0xff]
    %v54 = vld [vmem:[#allocation2 + $0x8] sm:$0xff]
    %v55 = vld [vmem:[#allocation5] sm:$0xff]
    %v56 = vld [vmem:[#allocation5 + $0x8] sm:$0xff]
    %v57 = vand.u32 2147483647, %v53
    %v58 = vand.u32 2147483647, %v54
    %v59 = vsub.f32 0.0, %v57
    %v60 = vsub.f32 0.0, %v58
    %v61 = vmul.f32 %v59, 1.442695
    %v62 = vpow.pop %v61
    %v63 = vmul.f32 %v60, 1.442695
    %v64 = vpow.pop %v63
    %v65 = vadd.f32 %v62, 1.0
    %v66 = vlog2.pop %v65
    %v67 = vmul.f32 %v66, 0.6931472
    %v68 = vmul.f32 -0.5, %v62
    %v69 = vadd.f32 %v68, 1.0
    %v70 = vmul.f32 %v69, %v62
    %v71 = vand.u32 2147483647, %v62
    %vm72 = vcmp.lt.f32.partialorder %v71, 0.0004427343
    %v73 = vsel %vm72, %v70, %v67
    %v74 = vadd.f32 %v64, 1.0
    %v75 = vlog2.pop %v74
    %v76 = vmul.f32 %v75, 0.6931472
    %v77 = vmul.f32 -0.5, %v64
    %v78 = vadd.f32 %v77, 1.0
    %v79 = vmul.f32 %v78, %v64
    %v80 = vand.u32 2147483647, %v64
    %vm81 = vcmp.lt.f32.partialorder %v80, 0.0004427343
    %v82 = vsel %vm81, %v79, %v76
    %v83 = vmin.f32 %v53, 0.0
    %v84 = vmin.f32 %v54, 0.0
    %v85 = vsub.f32 %v83, %v73
    %v86 = vsub.f32 %v84, %v82
    %v87 = vsub.f32 %v85, %v53
    %v88 = vsub.f32 %v86, %v54
    %v89 = vmul.f32 %v87, 0.25
    %v90 = vmul.f32 %v88, 0.25
    %v91 = vmul.f32 %v89, 1.442695
    %v92 = vpow.pop %v91
    %v93 = vmul.f32 %v90, 1.442695
    %v94 = vpow.pop %v93
    %v95 = vmul.f32 %v92, %v85
    %v96 = vmul.f32 %v94, %v86
    %v97 = vmul.f32 %v85, 0.25
    %v98 = vmul.f32 %v86, 0.25
    %v99 = vmul.f32 %v97, 1.442695
    %v100 = vpow.pop %v99
    %v101 = vmul.f32 %v98, 1.442695
    %v102 = vpow.pop %v101
    %v103 = vmul.f32 %v100, %v87
    %v104 = vmul.f32 %v102, %v88
    %v105 = vadd.f32 %v55, %v56
    %v106 = vadd.f32 %v95, %v96
    %v107 = vadd.f32 %v103, %v104
    %v108 = vmul.f32 %v105, %v106
    %v109 = vsub.f32 2.0, %v105
    %v110 = vmul.f32 %v109, %v107
    %v111 = vadd.f32 %v108, %v110
    %v112 = vld [vmem:[#allocation7] sm:$0xff]
    %v113 = vadd.f32 %v111, 0.0
    %v114 = vadd.f32 %v112, %v113
    %115 = vst [vmem:[#allocation7] sm:$0xff] %v114
    // Predicated region
    $region22: #{tpu_custom_call.1} parent=1 // pred_check
      _
    $region23: #{tpu_custom_call.1} parent=1 // pred_check_branch
      %117 = sbr.rel (0) target = $region25
    $region24: #{tpu_custom_call.1} parent=1 // pred_region
      %s119 = ssub.s32 128, 128
      %120 = vsyncadd [#allocation4], %s119
      %s122 = sshll.u32 [#allocation7], 4
      %s123 = int_to_ptr.vmem [resolvable:$true] %s122
      %125 = dma.vmem_to_hbm [thread:$0]  %s123, 128, %s2, [#allocation4]
    $region25: #{tpu_custom_call.1} parent=1 // pred_fallthru
      _
    // Predicated region
    $region26: #{tpu_custom_call.1} parent=1 // pred_check
      _
    $region27: #{tpu_custom_call.1} parent=1 // pred_check_branch
      %127 = sbr.rel (0) target = $region29
    $region28: #{tpu_custom_call.1} parent=1 // pred_region
      %128 = dma.done [#allocation4], 128
    $region29: #{tpu_custom_call.1} parent=1 // pred_fallthru
      _
    %129 = vsyncpa [#allocation3], 1
    %130 = vsyncpa [#allocation6], 1
    %131 = vsyncpa [#allocation4], 1

</llo_original>
